<compile_context>
chip_gen: v5e
topology: v5e:2x2
jax: 0.10.0
libtpu: 0.0.40
codegen_flags: <defaults>
</compile_context>

<pallas_src>
import jax
import jax.numpy as jnp
from jax.experimental import pallas as pl
from jax.experimental.pallas import tpu as pltpu

LANES = 128      # vreg lane width
SUBLANES = 8     # vreg sublane count (f32)


def _make_mlp_kernel(H):
    """Kernel over one (2, R, 128) dense batch tile; H is a static Python int."""

    def kernel(params_ref, x_ref, o_ref):
        # params_ref: SMEM f32[5H + 2], flat layout [w1(2H) | b1(H) | w2(2H) | b2(2)]
        #   w1[i, j] -> i*H + j        (x @ w1, w1 stored (in=2, out=H))
        #   b1[j]    -> 2H + j
        #   w2[j, k] -> 3H + 2*j + k   (h @ w2, w2 stored (in=H, out=2))
        #   b2[k]    -> 5H + k
        # x_ref / o_ref: VMEM (2, R, 128) — feature planes, sublane+lane dense.
        x0 = x_ref[0].astype(jnp.float32)        # (R, 128)  feature 0
        x1 = x_ref[1].astype(jnp.float32)        # (R, 128)  feature 1

        acc0 = None
        acc1 = None
        # Unrolled over the H hidden units: pure VPU FMAs + EUP tanh.
        for j in range(H):
            hj = jnp.tanh(params_ref[j] * x0
                          + params_ref[H + j] * x1
                          + params_ref[2 * H + j])            # (R, 128)
            t0 = params_ref[3 * H + 2 * j + 0] * hj
            t1 = params_ref[3 * H + 2 * j + 1] * hj
            acc0 = t0 if acc0 is None else acc0 + t0
            acc1 = t1 if acc1 is None else acc1 + t1

        z0 = acc0 + params_ref[5 * H + 0]
        z1 = acc1 + params_ref[5 * H + 1]
        # sigmoid(z) = 0.5 * tanh(0.5 * z) + 0.5 : one EUP op per output plane.
        y0 = 0.5 * jnp.tanh(0.5 * z0) + 0.5
        y1 = 0.5 * jnp.tanh(0.5 * z1) + 0.5

        # Two direct full-width, unmasked plane stores (no sublane concatenate).
        o_ref[0] = y0.astype(o_ref.dtype)
        o_ref[1] = y1.astype(o_ref.dtype)

    return kernel


def _choose_tile_rows(n_rows, tb_samples):
    """Rows (of 128 samples each) per grid tile."""
    if tb_samples is not None:
        cap = max(1, tb_samples // LANES)
    else:
        # 2048 rows = 256K samples/tile -> ~8 MiB double-buffered in+out (f32),
        # under v5e's 16 MiB default scoped VMEM, comfortable on v6e/v7x.
        cap = 2048
    if n_rows <= cap:
        if n_rows < 2 * SUBLANES:
            # Tiny batch: single tile whose block extent equals the full
            # (padded) extent — satisfies the (8, 128) block constraint.
            return n_rows
        n_tiles = 2          # >=2 tiles so "parallel" feeds both v7x TCs
    else:
        n_tiles = max(pl.cdiv(n_rows, cap), 2)
    rows = pl.cdiv(n_rows, n_tiles)
    return pl.cdiv(rows, SUBLANES) * SUBLANES     # multiple of 8 sublanes


def simple_estimator_forward(x, w1, b1, w2, b2, *, tb=None, io_dtype=jnp.float32):
    """Forward pass of SimpleEstimator.

    x: (B, 2). w1: (2, H), b1: (1, H), w2: (H, 2), b2: (1, 2)
    (weights stored transposed relative to PyTorch so math is x @ W + b).
    Returns (B, 2) in x.dtype.  io_dtype=jnp.bfloat16 halves HBM traffic
    (compute stays f32) but needs a relaxed (~1e-2) tolerance.
    """
    B = x.shape[0]
    H = w1.shape[1]
    assert x.shape[1] == 2 and w1.shape == (2, H)
    assert w2.shape == (H, 2)

    # Flatten all parameters into one tiny 1-D SMEM-resident array (5H+2 floats).
    params = jnp.concatenate(
        [w1.reshape(-1), b1.reshape(-1), w2.reshape(-1), b2.reshape(-1)]
    ).astype(jnp.float32)

    n_rows = pl.cdiv(B, LANES)                 # rows of 128 samples (pre-pad)
    tile_rows = _choose_tile_rows(n_rows, tb)
    n_tiles = pl.cdiv(n_rows, tile_rows)
    rows_padded = n_tiles * tile_rows
    Bp = rows_padded * LANES

    # Dense (feature, row, lane) layout; transpose + pad + reshape are wrapper-
    # side layout plumbing that XLA fuses into one pass over the input.
    xT = jnp.transpose(x).astype(io_dtype)     # (2, B)
    if Bp != B:
        xT = jnp.pad(xT, ((0, 0), (0, Bp - B)))
    xT = xT.reshape(2, rows_padded, LANES)     # free row-major reshape

    outT = pl.pallas_call(
        _make_mlp_kernel(H),
        out_shape=jax.ShapeDtypeStruct((2, rows_padded, LANES), io_dtype),
        grid_spec=pltpu.PrefetchScalarGridSpec(
            num_scalar_prefetch=0,
            grid=(n_tiles,),
            in_specs=[
                # All weights/biases as one flat scalar array in SMEM.
                pl.BlockSpec(memory_space=pltpu.MemorySpace.SMEM),
                # Input tile: both feature planes, sublane/lane-dense batch tile.
                pl.BlockSpec((2, tile_rows, LANES), lambda i: (0, i, 0)),
            ],
            out_specs=pl.BlockSpec((2, tile_rows, LANES), lambda i: (0, i, 0)),
        ),
        compiler_params=pltpu.CompilerParams(
            dimension_semantics=("parallel",),
        ),
    )(params, xT)

    # Drop batch padding, back to (B, 2).
    out = outT.reshape(2, Bp)[:, :B]
    return jnp.transpose(out).astype(x.dtype)


def init_params(neurons=6, seed=0):
    """Deterministic parameter init (matching PyTorch Linear shapes).

    PyTorch stores Linear weight as (out, in); we store (in, out) so the
    forward computes x @ W directly.
    """
    key = jax.random.PRNGKey(seed)
    k1, k2, k3, k4 = jax.random.split(key, 4)

    # nn.Linear(2, neurons)
    bound1 = 1.0 / jnp.sqrt(2.0)
    w1 = jax.random.uniform(k1, (2, neurons), jnp.float32, -bound1, bound1)
    b1 = jax.random.uniform(k2, (1, neurons), jnp.float32, -bound1, bound1)

    # nn.Linear(neurons, 2)
    bound2 = 1.0 / jnp.sqrt(float(neurons))
    w2 = jax.random.uniform(k3, (neurons, 2), jnp.float32, -bound2, bound2)
    b2 = jax.random.uniform(k4, (1, 2), jnp.float32, -bound2, bound2)

    return w1, b1, w2, b2


if __name__ == "__main__":
    neurons = 6
    key = jax.random.PRNGKey(0)
    w1, b1, w2, b2 = init_params(neurons=neurons, seed=0)

    # 300: non-multiple-of-128 batch -> padding + single full-extent tile.
    # 4096: 32 rows -> two 16-row tiles (multi-tile "parallel" grid path).
    for batch in (300, 4096):
        kx = jax.random.fold_in(key, batch)
        x = jax.random.normal(kx, (batch, 2), dtype=jnp.float32)

        out = simple_estimator_forward(x, w1, b1, w2, b2)
        out = jax.block_until_ready(out)

        # Reference check in plain JAX (same math).
        ref = jax.nn.sigmoid(jnp.tanh(x @ w1 + b1) @ w2 + b2)
        assert out.shape == (batch, 2)
        assert jnp.allclose(out, ref, atol=1e-5, rtol=1e-5), float(
            jnp.max(jnp.abs(out - ref))
        )

    print("KERNEL_OK")
</pallas_src>

<mosaic_0001>
module attributes {stable_mosaic.version = 11 : i64} {
  func.func @kernel(%arg0: i32, %arg1: memref<32xf32, #tpu.memory_space<smem>>, %arg2: memref<2x3x128xf32, #tpu.memory_space<vmem>>, %arg3: memref<2x3x128xf32, #tpu.memory_space<vmem>>) attributes {dimension_semantics = [#tpu.dimension_semantics<parallel>], iteration_bounds = array<i64: 1>, scalar_prefetch = 0 : i64, scratch_operands = 0 : i64, tpu.core_type = #tpu.core_type<tc>, window_params = [{transform_indices = @transform_0, window_bounds = array<i64: 32>}, {transform_indices = @transform_1, window_bounds = array<i64: 2, 3, 128>}, {transform_indices = @transform_2, window_bounds = array<i64: 2, 3, 128>}]} {
    %c0 = arith.constant 0 : index
    %c0_0 = arith.constant 0 : index
    %c0_1 = arith.constant 0 : index
    %0 = vector.load %arg2[%c0, %c0_0, %c0_1] : memref<2x3x128xf32, #tpu.memory_space<vmem>>, vector<1x3x128xf32>
    %1 = vector.shape_cast %0 : vector<1x3x128xf32> to vector<3x128xf32>
    %c1 = arith.constant 1 : index
    %c0_2 = arith.constant 0 : index
    %c0_3 = arith.constant 0 : index
    %2 = vector.load %arg2[%c1, %c0_2, %c0_3] : memref<2x3x128xf32, #tpu.memory_space<vmem>>, vector<1x3x128xf32>
    %3 = vector.shape_cast %2 : vector<1x3x128xf32> to vector<3x128xf32>
    %c0_4 = arith.constant 0 : index
    %4 = memref.load %arg1[%c0_4] : memref<32xf32, #tpu.memory_space<smem>>
    %5 = vector.broadcast %4 : f32 to vector<3x128xf32>
    %6 = arith.mulf %5, %1 : vector<3x128xf32>
    %c6 = arith.constant 6 : index
    %7 = memref.load %arg1[%c6] : memref<32xf32, #tpu.memory_space<smem>>
    %8 = vector.broadcast %7 : f32 to vector<3x128xf32>
    %9 = arith.mulf %8, %3 : vector<3x128xf32>
    %10 = arith.addf %6, %9 : vector<3x128xf32>
    %c12 = arith.constant 12 : index
    %11 = memref.load %arg1[%c12] : memref<32xf32, #tpu.memory_space<smem>>
    %12 = vector.broadcast %11 : f32 to vector<3x128xf32>
    %13 = arith.addf %10, %12 : vector<3x128xf32>
    %14 = math.tanh %13 : vector<3x128xf32>
    %c18 = arith.constant 18 : index
    %15 = memref.load %arg1[%c18] : memref<32xf32, #tpu.memory_space<smem>>
    %16 = vector.broadcast %15 : f32 to vector<3x128xf32>
    %17 = arith.mulf %16, %14 : vector<3x128xf32>
    %c19 = arith.constant 19 : index
    %18 = memref.load %arg1[%c19] : memref<32xf32, #tpu.memory_space<smem>>
    %19 = vector.broadcast %18 : f32 to vector<3x128xf32>
    %20 = arith.mulf %19, %14 : vector<3x128xf32>
    %c1_5 = arith.constant 1 : index
    %21 = memref.load %arg1[%c1_5] : memref<32xf32, #tpu.memory_space<smem>>
    %22 = vector.broadcast %21 : f32 to vector<3x128xf32>
    %23 = arith.mulf %22, %1 : vector<3x128xf32>
    %c7 = arith.constant 7 : index
    %24 = memref.load %arg1[%c7] : memref<32xf32, #tpu.memory_space<smem>>
    %25 = vector.broadcast %24 : f32 to vector<3x128xf32>
    %26 = arith.mulf %25, %3 : vector<3x128xf32>
    %27 = arith.addf %23, %26 : vector<3x128xf32>
    %c13 = arith.constant 13 : index
    %28 = memref.load %arg1[%c13] : memref<32xf32, #tpu.memory_space<smem>>
    %29 = vector.broadcast %28 : f32 to vector<3x128xf32>
    %30 = arith.addf %27, %29 : vector<3x128xf32>
    %31 = math.tanh %30 : vector<3x128xf32>
    %c20 = arith.constant 20 : index
    %32 = memref.load %arg1[%c20] : memref<32xf32, #tpu.memory_space<smem>>
    %33 = vector.broadcast %32 : f32 to vector<3x128xf32>
    %34 = arith.mulf %33, %31 : vector<3x128xf32>
    %c21 = arith.constant 21 : index
    %35 = memref.load %arg1[%c21] : memref<32xf32, #tpu.memory_space<smem>>
    %36 = vector.broadcast %35 : f32 to vector<3x128xf32>
    %37 = arith.mulf %36, %31 : vector<3x128xf32>
    %38 = arith.addf %17, %34 : vector<3x128xf32>
    %39 = arith.addf %20, %37 : vector<3x128xf32>
    %c2 = arith.constant 2 : index
    %40 = memref.load %arg1[%c2] : memref<32xf32, #tpu.memory_space<smem>>
    %41 = vector.broadcast %40 : f32 to vector<3x128xf32>
    %42 = arith.mulf %41, %1 : vector<3x128xf32>
    %c8 = arith.constant 8 : index
    %43 = memref.load %arg1[%c8] : memref<32xf32, #tpu.memory_space<smem>>
    %44 = vector.broadcast %43 : f32 to vector<3x128xf32>
    %45 = arith.mulf %44, %3 : vector<3x128xf32>
    %46 = arith.addf %42, %45 : vector<3x128xf32>
    %c14 = arith.constant 14 : index
    %47 = memref.load %arg1[%c14] : memref<32xf32, #tpu.memory_space<smem>>
    %48 = vector.broadcast %47 : f32 to vector<3x128xf32>
    %49 = arith.addf %46, %48 : vector<3x128xf32>
    %50 = math.tanh %49 : vector<3x128xf32>
    %c22 = arith.constant 22 : index
    %51 = memref.load %arg1[%c22] : memref<32xf32, #tpu.memory_space<smem>>
    %52 = vector.broadcast %51 : f32 to vector<3x128xf32>
    %53 = arith.mulf %52, %50 : vector<3x128xf32>
    %c23 = arith.constant 23 : index
    %54 = memref.load %arg1[%c23] : memref<32xf32, #tpu.memory_space<smem>>
    %55 = vector.broadcast %54 : f32 to vector<3x128xf32>
    %56 = arith.mulf %55, %50 : vector<3x128xf32>
    %57 = arith.addf %38, %53 : vector<3x128xf32>
    %58 = arith.addf %39, %56 : vector<3x128xf32>
    %c3 = arith.constant 3 : index
    %59 = memref.load %arg1[%c3] : memref<32xf32, #tpu.memory_space<smem>>
    %60 = vector.broadcast %59 : f32 to vector<3x128xf32>
    %61 = arith.mulf %60, %1 : vector<3x128xf32>
    %c9 = arith.constant 9 : index
    %62 = memref.load %arg1[%c9] : memref<32xf32, #tpu.memory_space<smem>>
    %63 = vector.broadcast %62 : f32 to vector<3x128xf32>
    %64 = arith.mulf %63, %3 : vector<3x128xf32>
    %65 = arith.addf %61, %64 : vector<3x128xf32>
    %c15 = arith.constant 15 : index
    %66 = memref.load %arg1[%c15] : memref<32xf32, #tpu.memory_space<smem>>
    %67 = vector.broadcast %66 : f32 to vector<3x128xf32>
    %68 = arith.addf %65, %67 : vector<3x128xf32>
    %69 = math.tanh %68 : vector<3x128xf32>
    %c24 = arith.constant 24 : index
    %70 = memref.load %arg1[%c24] : memref<32xf32, #tpu.memory_space<smem>>
    %71 = vector.broadcast %70 : f32 to vector<3x128xf32>
    %72 = arith.mulf %71, %69 : vector<3x128xf32>
    %c25 = arith.constant 25 : index
    %73 = memref.load %arg1[%c25] : memref<32xf32, #tpu.memory_space<smem>>
    %74 = vector.broadcast %73 : f32 to vector<3x128xf32>
    %75 = arith.mulf %74, %69 : vector<3x128xf32>
    %76 = arith.addf %57, %72 : vector<3x128xf32>
    %77 = arith.addf %58, %75 : vector<3x128xf32>
    %c4 = arith.constant 4 : index
    %78 = memref.load %arg1[%c4] : memref<32xf32, #tpu.memory_space<smem>>
    %79 = vector.broadcast %78 : f32 to vector<3x128xf32>
    %80 = arith.mulf %79, %1 : vector<3x128xf32>
    %c10 = arith.constant 10 : index
    %81 = memref.load %arg1[%c10] : memref<32xf32, #tpu.memory_space<smem>>
    %82 = vector.broadcast %81 : f32 to vector<3x128xf32>
    %83 = arith.mulf %82, %3 : vector<3x128xf32>
    %84 = arith.addf %80, %83 : vector<3x128xf32>
    %c16 = arith.constant 16 : index
    %85 = memref.load %arg1[%c16] : memref<32xf32, #tpu.memory_space<smem>>
    %86 = vector.broadcast %85 : f32 to vector<3x128xf32>
    %87 = arith.addf %84, %86 : vector<3x128xf32>
    %88 = math.tanh %87 : vector<3x128xf32>
    %c26 = arith.constant 26 : index
    %89 = memref.load %arg1[%c26] : memref<32xf32, #tpu.memory_space<smem>>
    %90 = vector.broadcast %89 : f32 to vector<3x128xf32>
    %91 = arith.mulf %90, %88 : vector<3x128xf32>
    %c27 = arith.constant 27 : index
    %92 = memref.load %arg1[%c27] : memref<32xf32, #tpu.memory_space<smem>>
    %93 = vector.broadcast %92 : f32 to vector<3x128xf32>
    %94 = arith.mulf %93, %88 : vector<3x128xf32>
    %95 = arith.addf %76, %91 : vector<3x128xf32>
    %96 = arith.addf %77, %94 : vector<3x128xf32>
    %c5 = arith.constant 5 : index
    %97 = memref.load %arg1[%c5] : memref<32xf32, #tpu.memory_space<smem>>
    %98 = vector.broadcast %97 : f32 to vector<3x128xf32>
    %99 = arith.mulf %98, %1 : vector<3x128xf32>
    %c11 = arith.constant 11 : index
    %100 = memref.load %arg1[%c11] : memref<32xf32, #tpu.memory_space<smem>>
    %101 = vector.broadcast %100 : f32 to vector<3x128xf32>
    %102 = arith.mulf %101, %3 : vector<3x128xf32>
    %103 = arith.addf %99, %102 : vector<3x128xf32>
    %c17 = arith.constant 17 : index
    %104 = memref.load %arg1[%c17] : memref<32xf32, #tpu.memory_space<smem>>
    %105 = vector.broadcast %104 : f32 to vector<3x128xf32>
    %106 = arith.addf %103, %105 : vector<3x128xf32>
    %107 = math.tanh %106 : vector<3x128xf32>
    %c28 = arith.constant 28 : index
    %108 = memref.load %arg1[%c28] : memref<32xf32, #tpu.memory_space<smem>>
    %109 = vector.broadcast %108 : f32 to vector<3x128xf32>
    %110 = arith.mulf %109, %107 : vector<3x128xf32>
    %c29 = arith.constant 29 : index
    %111 = memref.load %arg1[%c29] : memref<32xf32, #tpu.memory_space<smem>>
    %112 = vector.broadcast %111 : f32 to vector<3x128xf32>
    %113 = arith.mulf %112, %107 : vector<3x128xf32>
    %114 = arith.addf %95, %110 : vector<3x128xf32>
    %115 = arith.addf %96, %113 : vector<3x128xf32>
    %c30 = arith.constant 30 : index
    %116 = memref.load %arg1[%c30] : memref<32xf32, #tpu.memory_space<smem>>
    %117 = vector.broadcast %116 : f32 to vector<3x128xf32>
    %118 = arith.addf %114, %117 : vector<3x128xf32>
    %c31 = arith.constant 31 : index
    %119 = memref.load %arg1[%c31] : memref<32xf32, #tpu.memory_space<smem>>
    %120 = vector.broadcast %119 : f32 to vector<3x128xf32>
    %121 = arith.addf %115, %120 : vector<3x128xf32>
    %cst = arith.constant 5.000000e-01 : f32
    %122 = vector.broadcast %cst : f32 to vector<3x128xf32>
    %123 = arith.mulf %122, %118 : vector<3x128xf32>
    %124 = math.tanh %123 : vector<3x128xf32>
    %cst_6 = arith.constant 5.000000e-01 : f32
    %125 = vector.broadcast %cst_6 : f32 to vector<3x128xf32>
    %126 = arith.mulf %125, %124 : vector<3x128xf32>
    %cst_7 = arith.constant 5.000000e-01 : f32
    %127 = vector.broadcast %cst_7 : f32 to vector<3x128xf32>
    %128 = arith.addf %126, %127 : vector<3x128xf32>
    %cst_8 = arith.constant 5.000000e-01 : f32
    %129 = vector.broadcast %cst_8 : f32 to vector<3x128xf32>
    %130 = arith.mulf %129, %121 : vector<3x128xf32>
    %131 = math.tanh %130 : vector<3x128xf32>
    %cst_9 = arith.constant 5.000000e-01 : f32
    %132 = vector.broadcast %cst_9 : f32 to vector<3x128xf32>
    %133 = arith.mulf %132, %131 : vector<3x128xf32>
    %cst_10 = arith.constant 5.000000e-01 : f32
    %134 = vector.broadcast %cst_10 : f32 to vector<3x128xf32>
    %135 = arith.addf %133, %134 : vector<3x128xf32>
    %c0_11 = arith.constant 0 : index
    %c0_12 = arith.constant 0 : index
    %c0_13 = arith.constant 0 : index
    %136 = vector.load %arg3[%c0_11, %c0_12, %c0_13] : memref<2x3x128xf32, #tpu.memory_space<vmem>>, vector<1x3x128xf32>
    %137 = vector.shape_cast %136 : vector<1x3x128xf32> to vector<3x128xf32>
    %138 = vector.shape_cast %128 : vector<3x128xf32> to vector<1x3x128xf32>
    tpu.vector_store %arg3[%c0_11, %c0_12, %c0_13], %138 {strides = array<i32>} : memref<2x3x128xf32, #tpu.memory_space<vmem>>, vector<1x3x128xf32>,
    %c1_14 = arith.constant 1 : index
    %c0_15 = arith.constant 0 : index
    %c0_16 = arith.constant 0 : index
    %139 = vector.load %arg3[%c1_14, %c0_15, %c0_16] : memref<2x3x128xf32, #tpu.memory_space<vmem>>, vector<1x3x128xf32>
    %140 = vector.shape_cast %139 : vector<1x3x128xf32> to vector<3x128xf32>
    %141 = vector.shape_cast %135 : vector<3x128xf32> to vector<1x3x128xf32>
    tpu.vector_store %arg3[%c1_14, %c0_15, %c0_16], %141 {strides = array<i32>} : memref<2x3x128xf32, #tpu.memory_space<vmem>>, vector<1x3x128xf32>,
    return
  }
  func.func @transform_0(%arg0: i32) -> i32 {
    %c0_i32 = arith.constant 0 : i32
    %c0_i32_0 = arith.constant 0 : i32
    return %c0_i32 : i32
  }
  func.func @transform_1(%arg0: i32) -> (i32, i32, i32) {
    %c0_i32 = arith.constant 0 : i32
    %c0_i32_0 = arith.constant 0 : i32
    %c0_i32_1 = arith.constant 0 : i32
    return %c0_i32, %arg0, %c0_i32_0 : i32, i32, i32
  }
  func.func @transform_2(%arg0: i32) -> (i32, i32, i32) {
    %c0_i32 = arith.constant 0 : i32
    %c0_i32_0 = arith.constant 0 : i32
    %c0_i32_1 = arith.constant 0 : i32
    return %c0_i32, %arg0, %c0_i32_0 : i32, i32, i32
  }
}

</mosaic_0001>

<llo_original>
// kernel: tpu_custom_call.1
$region0: #{tpu_custom_call.1}
  #allocation0 [shape = 'u32[]', space=smem, size = 0x4, offset = 0x4, fixed_abs, tag = 'smem constant byte address 0x4 - core index']
  #allocation1 [shape = 'u32[72,128]{1,0:T(1,128)}', space=vmem, size = 0x9000, scoped, tag = 'internal scratch']
  %s0 = inlined_call_operand.vmem [shape: f32[32], index: 0, kind: input, shape index: {}]
  %s1 = inlined_call_operand.vmem [shape: f32[2,3,128], index: 1, kind: input, shape index: {}]
  %s2 = inlined_call_operand.vmem [shape: f32[2,3,128], index: 2, kind: output, shape index: {}]
  %s3 = sld [smem:[#allocation0]]
  $region22: #{tpu_custom_call.1} parent=0
    _
  %s5 = ssub.s32 1, %s3
  %s6 = scalar_select 0, %s5, %s3
  $region1: #{tpu_custom_call.1} parent=0
    #allocation2 [shape = 'u8[512]{0}', space=smem, size = 0x200, scoped, tag = 'input window, operand 0, single buffered']
    #allocation3 [shape = 's32[1]{0}', space=sflag, size = 0x4, scoped, tag = 'scoped memory for tpu_custom_call.1']
    %7 = vsyncpa [#allocation3], 0
    // Predicated region
    $region2: #{tpu_custom_call.1} parent=1 // pred_check
      _
    $region3: #{tpu_custom_call.1} parent=1 // pred_check_branch
      %9 = sbr.rel (0) target = $region5
    $region4: #{tpu_custom_call.1} parent=1 // pred_region
      %11 = vsyncadd [#allocation3], 0
      %s13 = sshll.u32 %s0, 4
      %s14 = int_to_ptr.vmem [resolvable:$true] %s13
      %16 = dma.vmem_to_smem %s14, 16, [#allocation2], [#allocation3]
    $region5: #{tpu_custom_call.1} parent=1 // pred_fallthru
      _
    // Predicated region
    $region6: #{tpu_custom_call.1} parent=1 // pred_check
      _
    $region7: #{tpu_custom_call.1} parent=1 // pred_check_branch
      %18 = sbr.rel (0) target = $region9
    $region8: #{tpu_custom_call.1} parent=1 // pred_region
      _
    $region9: #{tpu_custom_call.1} parent=1 // pred_fallthru
      _
    // Predicated region
    $region10: #{tpu_custom_call.1} parent=1 // pred_check
      _
    $region11: #{tpu_custom_call.1} parent=1 // pred_check_branch
      %20 = sbr.rel (0) target = $region13
    $region12: #{tpu_custom_call.1} parent=1 // pred_region
      %22 = dma.done [#allocation3], 16
    $region13: #{tpu_custom_call.1} parent=1 // pred_fallthru
      _
    %23 = sfence
    %v24 = vld [vmem:[%s1] sm:$0x7]
    %s25 = scalar_lea.vmem %s1, 4
    %v26 = vld [vmem:[%s25] sm:$0x7]
    %s27 = sld [smem:[#allocation2]]
    %v28 = vstv %s27
    %v29 = vmul.f32 %v28, %v24
    %s30 = sld [smem:[#allocation2 + $0x6]]
    %v31 = vstv %s30
    %v32 = vmul.f32 %v31, %v26
    %v33 = vadd.f32 %v29, %v32
    %s34 = sld [smem:[#allocation2 + $0xc]]
    %v35 = vstv %s34
    %v36 = vadd.f32 %v33, %v35
    %v37 = vtanh.pop %v36
    %s38 = sld [smem:[#allocation2 + $0x12]]
    %v39 = vstv %s38
    %v40 = vmul.f32 %v39, %v37
    %s41 = sld [smem:[#allocation2 + $0x13]]
    %v42 = vstv %s41
    %v43 = vmul.f32 %v42, %v37
    %s44 = sld [smem:[#allocation2 + $0x1]]
    %v45 = vstv %s44
    %v46 = vmul.f32 %v45, %v24
    %s47 = sld [smem:[#allocation2 + $0x7]]
    %v48 = vstv %s47
    %v49 = vmul.f32 %v48, %v26
    %v50 = vadd.f32 %v46, %v49
    %s51 = sld [smem:[#allocation2 + $0xd]]
    %v52 = vstv %s51
    %v53 = vadd.f32 %v50, %v52
    %v54 = vtanh.pop %v53
    %s55 = sld [smem:[#allocation2 + $0x14]]
    %v56 = vstv %s55
    %v57 = vmul.f32 %v56, %v54
    %s58 = sld [smem:[#allocation2 + $0x15]]
    %v59 = vstv %s58
    %v60 = vmul.f32 %v59, %v54
    %v61 = vadd.f32 %v40, %v57
    %v62 = vadd.f32 %v43, %v60
    %s63 = sld [smem:[#allocation2 + $0x2]]
    %v64 = vstv %s63
    %v65 = vmul.f32 %v64, %v24
    %s66 = sld [smem:[#allocation2 + $0x8]]
    %v67 = vstv %s66
    %v68 = vmul.f32 %v67, %v26
    %v69 = vadd.f32 %v65, %v68
    %s70 = sld [smem:[#allocation2 + $0xe]]
    %v71 = vstv %s70
    %v72 = vadd.f32 %v69, %v71
    %v73 = vtanh.pop %v72
    %s74 = sld [smem:[#allocation2 + $0x16]]
    %v75 = vstv %s74
    %v76 = vmul.f32 %v75, %v73
    %s77 = sld [smem:[#allocation2 + $0x17]]
    %v78 = vstv %s77
    %v79 = vmul.f32 %v78, %v73
    %v80 = vadd.f32 %v61, %v76
    %v81 = vadd.f32 %v62, %v79
    %s82 = sld [smem:[#allocation2 + $0x3]]
    %v83 = vstv %s82
    %v84 = vmul.f32 %v83, %v24
    %s85 = sld [smem:[#allocation2 + $0x9]]
    %v86 = vstv %s85
    %v87 = vmul.f32 %v86, %v26
    %v88 = vadd.f32 %v84, %v87
    %s89 = sld [smem:[#allocation2 + $0xf]]
    %v90 = vstv %s89
    %v91 = vadd.f32 %v88, %v90
    %v92 = vtanh.pop %v91
    %s93 = sld [smem:[#allocation2 + $0x18]]
    %v94 = vstv %s93
    %v95 = vmul.f32 %v94, %v92
    %s96 = sld [smem:[#allocation2 + $0x19]]
    %v97 = vstv %s96
    %v98 = vmul.f32 %v97, %v92
    %v99 = vadd.f32 %v80, %v95
    %v100 = vadd.f32 %v81, %v98
    %s101 = sld [smem:[#allocation2 + $0x4]]
    %v102 = vstv %s101
    %v103 = vmul.f32 %v102, %v24
    %s104 = sld [smem:[#allocation2 + $0xa]]
    %v105 = vstv %s104
    %v106 = vmul.f32 %v105, %v26
    %v107 = vadd.f32 %v103, %v106
    %s108 = sld [smem:[#allocation2 + $0x10]]
    %v109 = vstv %s108
    %v110 = vadd.f32 %v107, %v109
    %v111 = vtanh.pop %v110
    %s112 = sld [smem:[#allocation2 + $0x1a]]
    %v113 = vstv %s112
    %v114 = vmul.f32 %v113, %v111
    %s115 = sld [smem:[#allocation2 + $0x1b]]
    %v116 = vstv %s115
    %v117 = vmul.f32 %v116, %v111
    %v118 = vadd.f32 %v99, %v114
    %v119 = vadd.f32 %v100, %v117
    %s120 = sld [smem:[#allocation2 + $0x5]]
    %v121 = vstv %s120
    %v122 = vmul.f32 %v121, %v24
    %s123 = sld [smem:[#allocation2 + $0xb]]
    %v124 = vstv %s123
    %v125 = vmul.f32 %v124, %v26
    %v126 = vadd.f32 %v122, %v125
    %s127 = sld [smem:[#allocation2 + $0x11]]
    %v128 = vstv %s127
    %v129 = vadd.f32 %v126, %v128
    %v130 = vtanh.pop %v129
    %s131 = sld [smem:[#allocation2 + $0x1c]]
    %v132 = vstv %s131
    %v133 = vmul.f32 %v132, %v130
    %s134 = sld [smem:[#allocation2 + $0x1d]]
    %v135 = vstv %s134
    %v136 = vmul.f32 %v135, %v130
    %v137 = vadd.f32 %v118, %v133
    %v138 = vadd.f32 %v119, %v136
    %s139 = sld [smem:[#allocation2 + $0x1e]]
    %v140 = vstv %s139
    %v141 = vadd.f32 %v137, %v140
    %s142 = sld [smem:[#allocation2 + $0x1f]]
    %v143 = vstv %s142
    %v144 = vadd.f32 %v138, %v143
    %v145 = vmul.f32 %v141, 0.5
    %v146 = vtanh.pop %v145
    %v147 = vmul.f32 %v146, 0.5
    %v148 = vadd.f32 %v147, 0.5
    %v149 = vmul.f32 %v144, 0.5
    %v150 = vtanh.pop %v149
    %v151 = vmul.f32 %v150, 0.5
    %v152 = vadd.f32 %v151, 0.5
    %153 = vst [vmem:[%s2] sm:$0x7] %v148
    %s154 = scalar_lea.vmem %s2, 4
    %155 = vst [vmem:[%s154] sm:$0x7] %v152
    // Predicated region
    $region14: #{tpu_custom_call.1} parent=1 // pred_check
      _
    $region15: #{tpu_custom_call.1} parent=1 // pred_check_branch
      %157 = sbr.rel (0) target = $region17
    $region16: #{tpu_custom_call.1} parent=1 // pred_region
      _
    $region17: #{tpu_custom_call.1} parent=1 // pred_fallthru
      _
    // Predicated region
    $region18: #{tpu_custom_call.1} parent=1 // pred_check
      _
    $region19: #{tpu_custom_call.1} parent=1 // pred_check_branch
      %159 = sbr.rel (0) target = $region21
    $region20: #{tpu_custom_call.1} parent=1 // pred_region
      _
    $region21: #{tpu_custom_call.1} parent=1 // pred_fallthru
      _
    %160 = vsyncpa [#allocation3], 1

</llo_original>
